<compile_context>
chip_gen: v7x
topology: tpu7x:2x2x1
jax: 0.10.0
libtpu: 0.0.40
codegen_flags: <defaults>
</compile_context>

<pallas_src>
import jax
import jax.numpy as jnp
from jax.experimental import pallas as pl
from jax.experimental.pallas import tpu as pltpu

VERY_NEGATIVE_NUMBER = -1e30  # bias of padded out-channels so they never win the max

_CHUNK = 256  # rows per inner chunk: >=256 keeps the MXU output width full on v6e/v7x
              # while keeping live vregs / spills bounded.


def _round_up(a, b):
    return (a + b - 1) // b * b


def _conv1d_maxpool_kernel(x_ref, w_ref, o_ref, m_scr):
    """One row tile of fused conv1d + bias + channel-max.

    x_ref : (TN, C_in*L)      natural-layout input rows (straight from HBM, no relayout)
    w_ref : (P, C_in*L + 1)   tap-fused block-Toeplitz weights, row p = t*C_pad + c;
                              the last column carries the bias (ones-row trick)
    o_ref : (TN, L_out)       natural-layout output rows
    m_scr : (L_pad, _CHUNK)   f32 scratch: per-position channel maxes of one chunk
    """
    TN, L_out = o_ref.shape
    P = w_ref.shape[0]
    C_pad = P // L_out

    for j0 in range(0, TN, _CHUNK):                      # static unroll over row chunks
        ch = min(_CHUNK, TN - j0)

        # Rows -> lanes: one XLU transpose per chunk so the matmul result lands with
        # out-channels on sublanes (the channel-max becomes an aligned sublane reduce).
        xT = x_ref[pl.ds(j0, ch), :].T                                  # (CL, ch)
        xT = jnp.concatenate(
            [xT, jnp.ones((1, ch), dtype=xT.dtype)], axis=0)            # bias "ones" row

        # One fused MXU matmul per chunk (contraction C_in*L+1, streams P LHS rows).
        # w_ref is re-read from VMEM each chunk instead of being held resident in vregs:
        # VMEM loads are cheap, ~56 permanently-live vregs are not.
        r = jnp.dot(w_ref[...], xT, preferred_element_type=jnp.float32)  # (P, ch) f32

        # torch `.max(1)` over out-channels, per output position; each reduced row is
        # stored straight to VMEM scratch (no rows list / concatenate -> no spills).
        for t in range(L_out):                           # static; L_out is small
            grp = r[t * C_pad:(t + 1) * C_pad, :]        # sublane-aligned (C_pad, ch)
            m_scr[pl.ds(t, 1), pl.ds(0, ch)] = jnp.max(grp, axis=0, keepdims=True)

        # Back to natural row-major order and store directly; the lane-sparse
        # (ch, L_out) store is fine -- output bytes << input bytes.
        blk = m_scr[:, pl.ds(0, ch)].T                   # (ch, L_pad)
        o_ref[pl.ds(j0, ch), :] = blk[:, :L_out].astype(o_ref.dtype)


def _conv1d_maxpool_rows(x2, weight, bias):
    """x2: [N, C_in, L] -> [N, L_out]  (conv1d + bias, then max over out-channels)."""
    N, C_in, L = x2.shape
    C_out, c_in_w, K = weight.shape
    assert c_in_w == C_in
    L_out = L - K + 1
    assert L_out >= 1
    CL = C_in * L
    dtype = x2.dtype

    # ---- fused block-Toeplitz weights (tiny, built once in the wrapper) -------------
    C_pad = _round_up(C_out, 8)                  # aligned sublane groups in the kernel
    P = L_out * C_pad
    k_rel = jnp.arange(L)[None, :] - jnp.arange(L_out)[:, None]          # (L_out, L)
    valid = (k_rel >= 0) & (k_rel < K)
    w_gather = jnp.take(weight, jnp.clip(k_rel, 0, K - 1), axis=2)       # (C_out,C_in,L_out,L)
    w_gather = jnp.where(valid[None, None], w_gather, 0.0)
    w_blk = jnp.transpose(w_gather, (2, 0, 1, 3)).reshape(L_out, C_out, CL)
    b_blk = jnp.broadcast_to(bias.reshape(1, C_out, 1), (L_out, C_out, 1))
    w_aug = jnp.concatenate([w_blk, b_blk], axis=-1)      # bias rides in the last column
    if C_pad != C_out:
        pad = jnp.zeros((L_out, C_pad - C_out, CL + 1), w_aug.dtype)
        pad = pad.at[:, :, -1].set(VERY_NEGATIVE_NUMBER)  # padded channels always lose
        w_aug = jnp.concatenate([w_aug, pad], axis=1)
    w_aug = w_aug.reshape(P, CL + 1).astype(dtype)

    # ---- row tiling ------------------------------------------------------------------
    TN_CAP = 2048  # big tiles amortize per-step cost (review: go well past 512 on
                   # v5e/v6e); per-tile VMEM stays ~2-3 MiB so it is also v7x-safe.
    if N <= 8:
        TN = N                                   # block == full dim (always legal)
    else:
        TN = min(TN_CAP, (N // 8) * 8)           # sublane-aligned; a ragged tail tile is
                                                 # handled by Pallas' masked boundary
                                                 # block (no jnp.pad copy of x in HBM)
        if pl.cdiv(N, TN) < 2:
            # keep >=2 grid steps so both v7x TensorCores get a row tile
            TN = max(8, _round_up(pl.cdiv(N, 2), 8))
    grid_n = pl.cdiv(N, TN)

    x_flat = x2.reshape(N, CL)                   # free view: no transpose, no pad, no copy

    out = pl.pallas_call(
        _conv1d_maxpool_kernel,
        out_shape=jax.ShapeDtypeStruct((N, L_out), dtype),
        grid=(grid_n,),
        in_specs=[
            pl.BlockSpec((TN, CL), lambda i: (i, 0)),        # natural-layout row tile
            pl.BlockSpec((P, CL + 1), lambda i: (0, 0)),     # fused weights, resident
        ],
        out_specs=pl.BlockSpec((TN, L_out), lambda i: (i, 0)),  # natural-layout rows out
        scratch_shapes=[pltpu.VMEM((_round_up(L_out, 8), _CHUNK), jnp.float32)],
        compiler_params=pltpu.CompilerParams(dimension_semantics=("parallel",)),
    )(x_flat, w_aug)
    return out


def conv1d_and_max_pooling(x, weight, bias, *, stride=1, seq_len=None):
    """Forward pass of Conv1DAndMaxPooling.

    x: [B, S, C_in, L] (4-D branch) or [N, C_in, L] (3-D branch)
    weight: [C_out, C_in, K], bias: [C_out]
    returns [B, S, L_out] (4-D) or [N, L_out] (3-D)
    """
    if seq_len is not None:
        # TODO(synk): the masked max_pooling branch of the reference is ill-defined
        # (calls size(0) on a torch.Size and views a (values, indices) tuple); only the
        # seq_len=None path is implemented.
        raise NotImplementedError("seq_len masking branch not implemented")
    assert stride == 1, "only stride=1 (the module default) is implemented"

    if x.ndim == 4:
        B, S, C_in, L = x.shape
        out = _conv1d_maxpool_rows(x.reshape(B * S, C_in, L), weight, bias)
        return out.reshape(B, S, -1)   # matches `x.view(batch_size, -1, x.size(-1))`
    elif x.ndim == 3:
        return _conv1d_maxpool_rows(x, weight, bias)
    else:
        raise ValueError("expected a 3-D or 4-D input")


def _reference(x, weight, bias):
    B, S, C_in, L = x.shape
    xf = x.reshape(-1, C_in, L)
    y = jax.lax.conv_general_dilated(
        xf, weight, window_strides=(1,), padding="VALID",
        dimension_numbers=("NCH", "OIH", "NCH"))
    y = y + bias[None, :, None]
    y = jnp.max(y, axis=1)                # torch .max(1) values over out-channels
    return y.reshape(B, S, -1)


if __name__ == "__main__":
    key = jax.random.PRNGKey(0)
    B, S, C_in, L = 2, 8, 4, 16
    C_out, K = 32, 3

    kx, kw, kb = jax.random.split(key, 3)
    x = jax.random.normal(kx, (B, S, C_in, L), dtype=jnp.float32)
    # deterministic nn.Conv1d-style init: uniform in +/- 1/sqrt(C_in * K)
    bound = 1.0 / (C_in * K) ** 0.5
    weight = jax.random.uniform(kw, (C_out, C_in, K), jnp.float32, -bound, bound)
    bias = jax.random.uniform(kb, (C_out,), jnp.float32, -bound, bound)

    out = jax.block_until_ready(conv1d_and_max_pooling(x, weight, bias))
    ref = _reference(x, weight, bias)

    assert out.shape == (B, S, L - K + 1), out.shape
    assert jnp.allclose(out, ref, atol=1e-4, rtol=1e-4), "kernel output mismatch vs reference"
    print("KERNEL_OK")
</pallas_src>

<mosaic_0001>
module attributes {stable_mosaic.version = 11 : i64} {
  func.func @_conv1d_maxpool_kernel(%arg0: i32, %arg1: memref<8x64xf32, #tpu.memory_space<vmem>>, %arg2: memref<448x65xf32, #tpu.memory_space<vmem>>, %arg3: memref<8x14xf32, #tpu.memory_space<vmem>>, %arg4: memref<16x256xf32, #tpu.memory_space<vmem>>) attributes {dimension_semantics = [#tpu.dimension_semantics<parallel>], iteration_bounds = array<i64: 2>, scalar_prefetch = 0 : i64, scratch_operands = 1 : i64, tpu.core_type = #tpu.core_type<tc>, window_params = [{transform_indices = @transform_0, window_bounds = array<i64: 8, 64>}, {pipeline_mode = #tpu.pipeline_mode<synchronous>, transform_indices = @transform_1, window_bounds = array<i64: 448, 65>}, {transform_indices = @transform_2, window_bounds = array<i64: 8, 14>}]} {
    %c0 = arith.constant 0 : index
    %c0_0 = arith.constant 0 : index
    %0 = vector.load %arg1[%c0, %c0_0] : memref<8x64xf32, #tpu.memory_space<vmem>>, vector<8x64xf32>
    %1 = tpu.transpose %0, [1, 0] : vector<8x64xf32> -> vector<64x8xf32>
    %cst = arith.constant 1.000000e+00 : f32
    %2 = vector.broadcast %cst : f32 to vector<1x8xf32>
    %3 = tpu.concatenate %1, %2 in 0 : vector<64x8xf32>, vector<1x8xf32> -> vector<65x8xf32>
    %c0_1 = arith.constant 0 : index
    %c0_2 = arith.constant 0 : index
    %4 = vector.load %arg2[%c0_1, %c0_2] : memref<448x65xf32, #tpu.memory_space<vmem>>, vector<448x65xf32>
    %cst_3 = arith.constant dense<0.000000e+00> : vector<448x8xf32>
    %5 = tpu.matmul %4, %3, %cst_3 {dimension_numbers = #tpu.dot_dimension_numbers<[1], [0], [0], [1], [0, 0, 1, 1], [], []>} : vector<448x65xf32>, vector<65x8xf32>, vector<448x8xf32> -> vector<448x8xf32>
    %6 = vector.extract_strided_slice %5 {offsets = [0, 0], sizes = [32, 8], strides = [1, 1]} : vector<448x8xf32> to vector<32x8xf32>
    %cst_4 = arith.constant dense<0xFF800000> : vector<8xf32>
    %7 = vector.multi_reduction <maximumf>, %6, %cst_4 [0] : vector<32x8xf32> to vector<8xf32>
    %8 = vector.shape_cast %7 : vector<8xf32> to vector<1x8xf32>
    %c0_5 = arith.constant 0 : index
    %c0_6 = arith.constant 0 : index
    %9 = vector.load %arg4[%c0_5, %c0_6] : memref<16x256xf32, #tpu.memory_space<vmem>>, vector<1x8xf32>
    tpu.vector_store %arg4[%c0_5, %c0_6], %8 {strides = array<i32>} : memref<16x256xf32, #tpu.memory_space<vmem>>, vector<1x8xf32>,
    %10 = vector.extract_strided_slice %5 {offsets = [32, 0], sizes = [32, 8], strides = [1, 1]} : vector<448x8xf32> to vector<32x8xf32>
    %cst_7 = arith.constant dense<0xFF800000> : vector<8xf32>
    %11 = vector.multi_reduction <maximumf>, %10, %cst_7 [0] : vector<32x8xf32> to vector<8xf32>
    %12 = vector.shape_cast %11 : vector<8xf32> to vector<1x8xf32>
    %c1 = arith.constant 1 : index
    %c0_8 = arith.constant 0 : index
    %13 = vector.load %arg4[%c1, %c0_8] : memref<16x256xf32, #tpu.memory_space<vmem>>, vector<1x8xf32>
    tpu.vector_store %arg4[%c1, %c0_8], %12 {strides = array<i32>} : memref<16x256xf32, #tpu.memory_space<vmem>>, vector<1x8xf32>,
    %14 = vector.extract_strided_slice %5 {offsets = [64, 0], sizes = [32, 8], strides = [1, 1]} : vector<448x8xf32> to vector<32x8xf32>
    %cst_9 = arith.constant dense<0xFF800000> : vector<8xf32>
    %15 = vector.multi_reduction <maximumf>, %14, %cst_9 [0] : vector<32x8xf32> to vector<8xf32>
    %16 = vector.shape_cast %15 : vector<8xf32> to vector<1x8xf32>
    %c2 = arith.constant 2 : index
    %c0_10 = arith.constant 0 : index
    %17 = vector.load %arg4[%c2, %c0_10] : memref<16x256xf32, #tpu.memory_space<vmem>>, vector<1x8xf32>
    tpu.vector_store %arg4[%c2, %c0_10], %16 {strides = array<i32>} : memref<16x256xf32, #tpu.memory_space<vmem>>, vector<1x8xf32>,
    %18 = vector.extract_strided_slice %5 {offsets = [96, 0], sizes = [32, 8], strides = [1, 1]} : vector<448x8xf32> to vector<32x8xf32>
    %cst_11 = arith.constant dense<0xFF800000> : vector<8xf32>
    %19 = vector.multi_reduction <maximumf>, %18, %cst_11 [0] : vector<32x8xf32> to vector<8xf32>
    %20 = vector.shape_cast %19 : vector<8xf32> to vector<1x8xf32>
    %c3 = arith.constant 3 : index
    %c0_12 = arith.constant 0 : index
    %21 = vector.load %arg4[%c3, %c0_12] : memref<16x256xf32, #tpu.memory_space<vmem>>, vector<1x8xf32>
    tpu.vector_store %arg4[%c3, %c0_12], %20 {strides = array<i32>} : memref<16x256xf32, #tpu.memory_space<vmem>>, vector<1x8xf32>,
    %22 = vector.extract_strided_slice %5 {offsets = [128, 0], sizes = [32, 8], strides = [1, 1]} : vector<448x8xf32> to vector<32x8xf32>
    %cst_13 = arith.constant dense<0xFF800000> : vector<8xf32>
    %23 = vector.multi_reduction <maximumf>, %22, %cst_13 [0] : vector<32x8xf32> to vector<8xf32>
    %24 = vector.shape_cast %23 : vector<8xf32> to vector<1x8xf32>
    %c4 = arith.constant 4 : index
    %c0_14 = arith.constant 0 : index
    %25 = vector.load %arg4[%c4, %c0_14] : memref<16x256xf32, #tpu.memory_space<vmem>>, vector<1x8xf32>
    tpu.vector_store %arg4[%c4, %c0_14], %24 {strides = array<i32>} : memref<16x256xf32, #tpu.memory_space<vmem>>, vector<1x8xf32>,
    %26 = vector.extract_strided_slice %5 {offsets = [160, 0], sizes = [32, 8], strides = [1, 1]} : vector<448x8xf32> to vector<32x8xf32>
    %cst_15 = arith.constant dense<0xFF800000> : vector<8xf32>
    %27 = vector.multi_reduction <maximumf>, %26, %cst_15 [0] : vector<32x8xf32> to vector<8xf32>
    %28 = vector.shape_cast %27 : vector<8xf32> to vector<1x8xf32>
    %c5 = arith.constant 5 : index
    %c0_16 = arith.constant 0 : index
    %29 = vector.load %arg4[%c5, %c0_16] : memref<16x256xf32, #tpu.memory_space<vmem>>, vector<1x8xf32>
    tpu.vector_store %arg4[%c5, %c0_16], %28 {strides = array<i32>} : memref<16x256xf32, #tpu.memory_space<vmem>>, vector<1x8xf32>,
    %30 = vector.extract_strided_slice %5 {offsets = [192, 0], sizes = [32, 8], strides = [1, 1]} : vector<448x8xf32> to vector<32x8xf32>
    %cst_17 = arith.constant dense<0xFF800000> : vector<8xf32>
    %31 = vector.multi_reduction <maximumf>, %30, %cst_17 [0] : vector<32x8xf32> to vector<8xf32>
    %32 = vector.shape_cast %31 : vector<8xf32> to vector<1x8xf32>
    %c6 = arith.constant 6 : index
    %c0_18 = arith.constant 0 : index
    %33 = vector.load %arg4[%c6, %c0_18] : memref<16x256xf32, #tpu.memory_space<vmem>>, vector<1x8xf32>
    tpu.vector_store %arg4[%c6, %c0_18], %32 {strides = array<i32>} : memref<16x256xf32, #tpu.memory_space<vmem>>, vector<1x8xf32>,
    %34 = vector.extract_strided_slice %5 {offsets = [224, 0], sizes = [32, 8], strides = [1, 1]} : vector<448x8xf32> to vector<32x8xf32>
    %cst_19 = arith.constant dense<0xFF800000> : vector<8xf32>
    %35 = vector.multi_reduction <maximumf>, %34, %cst_19 [0] : vector<32x8xf32> to vector<8xf32>
    %36 = vector.shape_cast %35 : vector<8xf32> to vector<1x8xf32>
    %c7 = arith.constant 7 : index
    %c0_20 = arith.constant 0 : index
    %37 = vector.load %arg4[%c7, %c0_20] : memref<16x256xf32, #tpu.memory_space<vmem>>, vector<1x8xf32>
    tpu.vector_store %arg4[%c7, %c0_20], %36 {strides = array<i32>} : memref<16x256xf32, #tpu.memory_space<vmem>>, vector<1x8xf32>,
    %38 = vector.extract_strided_slice %5 {offsets = [256, 0], sizes = [32, 8], strides = [1, 1]} : vector<448x8xf32> to vector<32x8xf32>
    %cst_21 = arith.constant dense<0xFF800000> : vector<8xf32>
    %39 = vector.multi_reduction <maximumf>, %38, %cst_21 [0] : vector<32x8xf32> to vector<8xf32>
    %40 = vector.shape_cast %39 : vector<8xf32> to vector<1x8xf32>
    %c8 = arith.constant 8 : index
    %c0_22 = arith.constant 0 : index
    %41 = vector.load %arg4[%c8, %c0_22] : memref<16x256xf32, #tpu.memory_space<vmem>>, vector<1x8xf32>
    tpu.vector_store %arg4[%c8, %c0_22], %40 {strides = array<i32>} : memref<16x256xf32, #tpu.memory_space<vmem>>, vector<1x8xf32>,
    %42 = vector.extract_strided_slice %5 {offsets = [288, 0], sizes = [32, 8], strides = [1, 1]} : vector<448x8xf32> to vector<32x8xf32>
    %cst_23 = arith.constant dense<0xFF800000> : vector<8xf32>
    %43 = vector.multi_reduction <maximumf>, %42, %cst_23 [0] : vector<32x8xf32> to vector<8xf32>
    %44 = vector.shape_cast %43 : vector<8xf32> to vector<1x8xf32>
    %c9 = arith.constant 9 : index
    %c0_24 = arith.constant 0 : index
    %45 = vector.load %arg4[%c9, %c0_24] : memref<16x256xf32, #tpu.memory_space<vmem>>, vector<1x8xf32>
    tpu.vector_store %arg4[%c9, %c0_24], %44 {strides = array<i32>} : memref<16x256xf32, #tpu.memory_space<vmem>>, vector<1x8xf32>,
    %46 = vector.extract_strided_slice %5 {offsets = [320, 0], sizes = [32, 8], strides = [1, 1]} : vector<448x8xf32> to vector<32x8xf32>
    %cst_25 = arith.constant dense<0xFF800000> : vector<8xf32>
    %47 = vector.multi_reduction <maximumf>, %46, %cst_25 [0] : vector<32x8xf32> to vector<8xf32>
    %48 = vector.shape_cast %47 : vector<8xf32> to vector<1x8xf32>
    %c10 = arith.constant 10 : index
    %c0_26 = arith.constant 0 : index
    %49 = vector.load %arg4[%c10, %c0_26] : memref<16x256xf32, #tpu.memory_space<vmem>>, vector<1x8xf32>
    tpu.vector_store %arg4[%c10, %c0_26], %48 {strides = array<i32>} : memref<16x256xf32, #tpu.memory_space<vmem>>, vector<1x8xf32>,
    %50 = vector.extract_strided_slice %5 {offsets = [352, 0], sizes = [32, 8], strides = [1, 1]} : vector<448x8xf32> to vector<32x8xf32>
    %cst_27 = arith.constant dense<0xFF800000> : vector<8xf32>
    %51 = vector.multi_reduction <maximumf>, %50, %cst_27 [0] : vector<32x8xf32> to vector<8xf32>
    %52 = vector.shape_cast %51 : vector<8xf32> to vector<1x8xf32>
    %c11 = arith.constant 11 : index
    %c0_28 = arith.constant 0 : index
    %53 = vector.load %arg4[%c11, %c0_28] : memref<16x256xf32, #tpu.memory_space<vmem>>, vector<1x8xf32>
    tpu.vector_store %arg4[%c11, %c0_28], %52 {strides = array<i32>} : memref<16x256xf32, #tpu.memory_space<vmem>>, vector<1x8xf32>,
    %54 = vector.extract_strided_slice %5 {offsets = [384, 0], sizes = [32, 8], strides = [1, 1]} : vector<448x8xf32> to vector<32x8xf32>
    %cst_29 = arith.constant dense<0xFF800000> : vector<8xf32>
    %55 = vector.multi_reduction <maximumf>, %54, %cst_29 [0] : vector<32x8xf32> to vector<8xf32>
    %56 = vector.shape_cast %55 : vector<8xf32> to vector<1x8xf32>
    %c12 = arith.constant 12 : index
    %c0_30 = arith.constant 0 : index
    %57 = vector.load %arg4[%c12, %c0_30] : memref<16x256xf32, #tpu.memory_space<vmem>>, vector<1x8xf32>
    tpu.vector_store %arg4[%c12, %c0_30], %56 {strides = array<i32>} : memref<16x256xf32, #tpu.memory_space<vmem>>, vector<1x8xf32>,
    %58 = vector.extract_strided_slice %5 {offsets = [416, 0], sizes = [32, 8], strides = [1, 1]} : vector<448x8xf32> to vector<32x8xf32>
    %cst_31 = arith.constant dense<0xFF800000> : vector<8xf32>
    %59 = vector.multi_reduction <maximumf>, %58, %cst_31 [0] : vector<32x8xf32> to vector<8xf32>
    %60 = vector.shape_cast %59 : vector<8xf32> to vector<1x8xf32>
    %c13 = arith.constant 13 : index
    %c0_32 = arith.constant 0 : index
    %61 = vector.load %arg4[%c13, %c0_32] : memref<16x256xf32, #tpu.memory_space<vmem>>, vector<1x8xf32>
    tpu.vector_store %arg4[%c13, %c0_32], %60 {strides = array<i32>} : memref<16x256xf32, #tpu.memory_space<vmem>>, vector<1x8xf32>,
    %c0_33 = arith.constant 0 : index
    %c0_34 = arith.constant 0 : index
    %62 = vector.load %arg4[%c0_33, %c0_34] : memref<16x256xf32, #tpu.memory_space<vmem>>, vector<16x8xf32>
    %63 = tpu.transpose %62, [1, 0] : vector<16x8xf32> -> vector<8x16xf32>
    %64 = vector.extract_strided_slice %63 {offsets = [0, 0], sizes = [8, 14], strides = [1, 1]} : vector<8x16xf32> to vector<8x14xf32>
    %c0_35 = arith.constant 0 : index
    %c0_36 = arith.constant 0 : index
    %65 = vector.load %arg3[%c0_35, %c0_36] : memref<8x14xf32, #tpu.memory_space<vmem>>, vector<8x14xf32>
    tpu.vector_store %arg3[%c0_35, %c0_36], %64 {strides = array<i32>} : memref<8x14xf32, #tpu.memory_space<vmem>>, vector<8x14xf32>,
    return
  }
  func.func @transform_0(%arg0: i32) -> (i32, i32) {
    %c0_i32 = arith.constant 0 : i32
    %c0_i32_0 = arith.constant 0 : i32
    return %arg0, %c0_i32 : i32, i32
  }
  func.func @transform_1(%arg0: i32) -> (i32, i32) {
    %c0_i32 = arith.constant 0 : i32
    %c0_i32_0 = arith.constant 0 : i32
    %c0_i32_1 = arith.constant 0 : i32
    return %c0_i32, %c0_i32_0 : i32, i32
  }
  func.func @transform_2(%arg0: i32) -> (i32, i32) {
    %c0_i32 = arith.constant 0 : i32
    %c0_i32_0 = arith.constant 0 : i32
    return %arg0, %c0_i32 : i32, i32
  }
}

</mosaic_0001>

<llo_original>
// kernel: tpu_custom_call.1
$region0: #{tpu_custom_call.1}
  #allocation0 [shape = 'u32[]', space=smem, size = 0x4, offset = 0x4, fixed_abs, tag = 'smem constant byte address 0x4 - core index']
  #allocation1 [shape = 'u32[144,128]{1,0:T(1,128)}', space=vmem, size = 0x12000, scoped, tag = 'internal scratch']
  #allocation2 [shape = 'f32[16,256]{1,0:T(8,128)}', space=vmem, size = 0x4000, scoped, tag = 'scratch operand']
  %s0 = inlined_call_operand.vmem [shape: f32[16,64], index: 0, kind: input, shape index: {}]
  %s1 = inlined_call_operand.vmem [shape: f32[448,65], index: 1, kind: input, shape index: {}]
  %s2 = inlined_call_operand.hbm [shape: f32[16,14], index: 2, kind: output, shape index: {}]
  %s3 = sld [smem:[#allocation0]]
  $region41: #{tpu_custom_call.1} parent=0
    _
  %s5 = ssub.s32 1, %s3
  %s6 = scalar_select 0, %s5, %s3
  $region1: #{tpu_custom_call.1} parent=0
    #allocation3 [shape = 'u8[8192]{0}', space=vmem, size = 0x2000, scoped, tag = 'output window, operand 0']
    #allocation4 [shape = 's32[2]{0}', space=sflag, size = 0x8, scoped, tag = 'scoped memory for tpu_custom_call.1']
    %7 = vsyncpa [#allocation4], 0
    %s8 = scalar_lea.sflag [#allocation4], 1
    %9 = vsyncpa %s8, 0
    loop: start=0, step=1, limit=4
    $region2: #{tpu_custom_call.1} parent=1 // loop_pre_header
      _
    $region3: #{tpu_custom_call.1} parent=1 // loop_header
      %s11 = sphi 0, %s15
      %p12 = scmp.ge.s32.totalorder %s11, 4
      %s21 = sphi 0, %s23
      %s24 = sphi 0, %s21
      %s25 = sphi 0, %s24
      %s41 = sphi 0, %s25
      %s45 = sphi 0, %s45
      %s47 = sphi 0, %s45
      %s48 = sphi 0, %s47
      %s62 = sphi 0, %s48
      %s68 = sphi 0, %s70
      %s71 = sphi 0, %s68
      %s72 = sphi 0, %s71
      %s88 = sphi 0, %s72
    $region4: #{tpu_custom_call.1} parent=1 // loop_header_branch
      %14 = sbr.rel (%p12) target = $region8
    $region5: #{tpu_custom_call.1} parent=1 // loop_body
      %s16 = ssub.s32 %s11, 1
      %s17 = ssub.s32 %s11, 2
      %s18 = sadd.s32 %s11, 1
      %s19 = ssub.s32 %s11, %s18
      %p20 = scmp.eq.s32.totalorder %s19, 0
      %s22 = sadd.s32 %s21, 1
      %s23 = scalar_select %p20, %s21, %s22
      %p26 = pneg %p20
      %p27 = scmp.eq.s32.totalorder %s11, 1
      %p28 = por %p26, %p27
      %p29 = scmp.ne.s32.totalorder %s21, %s24
      %p30 = scmp.eq.s32.totalorder %s11, 0
      %p31 = por %p29, %p30
      %p32 = scmp.ne.s32.totalorder %s21, %s24
      %p33 = scmp.eq.s32.totalorder %s16, 1
      %p34 = por %p32, %p33
      %p35 = scmp.ne.s32.totalorder %s24, %s25
      %p36 = scmp.eq.s32.totalorder %s16, 0
      %p37 = por %p35, %p36
      %p38 = scmp.ne.s32.totalorder %s24, %s25
      %p39 = scmp.eq.s32.totalorder %s17, 1
      %p40 = por %p38, %p39
      %p42 = scmp.ne.s32.totalorder %s25, %s41
      %p43 = scmp.eq.s32.totalorder %s17, 0
      %p44 = por %p42, %p43
      %s46 = sadd.s32 %s45, 1
      %p49 = scmp.eq.s32.totalorder %s11, 1
      %p50 = scmp.ne.s32.totalorder %s45, %s47
      %p51 = scmp.eq.s32.totalorder %s11, 0
      %p52 = por %p50, %p51
      %p53 = scmp.ne.s32.totalorder %s45, %s47
      %p54 = scmp.eq.s32.totalorder %s16, 1
      %p55 = por %p53, %p54
      %p56 = scmp.ne.s32.totalorder %s47, %s48
      %p57 = scmp.eq.s32.totalorder %s16, 0
      %p58 = por %p56, %p57
      %p59 = scmp.ne.s32.totalorder %s47, %s48
      %p60 = scmp.eq.s32.totalorder %s17, 1
      %p61 = por %p59, %p60
      %p63 = scmp.ne.s32.totalorder %s48, %s62
      %p64 = scmp.eq.s32.totalorder %s17, 0
      %p65 = por %p63, %p64
      %s66 = ssub.s32 %s11, %s18
      %p67 = scmp.eq.s32.totalorder %s66, 0
      %s69 = sadd.s32 %s68, 1
      %s70 = scalar_select %p67, %s68, %s69
      %p73 = pneg %p67
      %p74 = scmp.eq.s32.totalorder %s11, 1
      %p75 = por %p73, %p74
      %p76 = scmp.ne.s32.totalorder %s68, %s71
      %p77 = scmp.eq.s32.totalorder %s11, 0
      %p78 = por %p76, %p77
      %p79 = scmp.ne.s32.totalorder %s68, %s71
      %p80 = scmp.eq.s32.totalorder %s16, 1
      %p81 = por %p79, %p80
      %p82 = scmp.ne.s32.totalorder %s71, %s72
      %p83 = scmp.eq.s32.totalorder %s16, 0
      %p84 = por %p82, %p83
      %p85 = scmp.ne.s32.totalorder %s71, %s72
      %p86 = scmp.eq.s32.totalorder %s17, 1
      %p87 = por %p85, %p86
      %p89 = scmp.ne.s32.totalorder %s72, %s88
      %p90 = scmp.eq.s32.totalorder %s17, 0
      %p91 = por %p89, %p90
      %p92 = scmp.le.s32.totalorder 1, %s11
      %p93 = scmp.lt.s32.totalorder %s11, 3
      %p94 = pnand %p92, %p93
      %p95 = pneg %p94
      // Predicated region
      $region9: #{tpu_custom_call.1} parent=5 // pred_check
        _
      $region10: #{tpu_custom_call.1} parent=5 // pred_check_branch
        %97 = sbr.rel (%p94) target = $region12
      $region11: #{tpu_custom_call.1} parent=5 // pred_region
        %s98 = ssub.s32 %s11, 1
        // Predicated region
        $region13: #{tpu_custom_call.1} parent=11 // pred_check
          %p99 = pneg %p58
        $region14: #{tpu_custom_call.1} parent=11 // pred_check_branch
          %101 = sbr.rel (%p99) target = $region16
        $region15: #{tpu_custom_call.1} parent=11 // pred_region
          _
        $region16: #{tpu_custom_call.1} parent=11 // pred_fallthru
          _
      $region12: #{tpu_custom_call.1} parent=5 // pred_fallthru
        _
      %p102 = scmp.lt.s32.totalorder %s11, 2
      // Predicated region
      $region17: #{tpu_custom_call.1} parent=5 // pred_check
        %p103 = pneg %p102
      $region18: #{tpu_custom_call.1} parent=5 // pred_check_branch
        %105 = sbr.rel (%p103) target = $region20
      $region19: #{tpu_custom_call.1} parent=5 // pred_region
        // Predicated region
        $region21: #{tpu_custom_call.1} parent=19 // pred_check
          %p106 = pneg %p31
        $region22: #{tpu_custom_call.1} parent=19 // pred_check_branch
          %108 = sbr.rel (%p106) target = $region24
        $region23: #{tpu_custom_call.1} parent=19 // pred_region
          %p109 = scmp.lt.s32.totalorder %s11, 1
          %s110 = scalar_select %p109, %s11, 1
          %s111 = smul.addr %s110, 8
          %s112 = scalar_lea.vmem %s0, %s111
        $region24: #{tpu_custom_call.1} parent=19 // pred_fallthru
          _
      $region20: #{tpu_custom_call.1} parent=5 // pred_fallthru
        _
      %p113 = scmp.le.s32.totalorder 1, %s11
      %p114 = scmp.lt.s32.totalorder %s11, 3
      %p115 = pnand %p113, %p114
      %p116 = pneg %p115
      // Predicated region
      $region25: #{tpu_custom_call.1} parent=5 // pred_check
        _
      $region26: #{tpu_custom_call.1} parent=5 // pred_check_branch
        %118 = sbr.rel (%p115) target = $region28
      $region27: #{tpu_custom_call.1} parent=5 // pred_region
        %s119 = ssub.s32 %s11, 1
        %p120 = scmp.lt.s32.totalorder %s16, 1
        %s121 = scalar_select %p120, %s16, 1
        %s122 = smul.addr %s121, 8
        %s123 = scalar_lea.vmem %s0, %s122
        %p124 = pneg %p37
        %p125 = pneg %p34
        %p126 = pneg %p58
        %p127 = pneg %p55
        %p128 = pneg %p84
        %p129 = pneg %p81
        %s130 = sand.u32 %s71, 1
        %s131 = scalar_lea.sflag [#allocation4], %s130
        %s132 = sand.u32 %s71, 1
        %s133 = smul.addr %s132, 8
        %s134 = scalar_lea.vmem [#allocation3], %s133
        %p135 = scmp.lt.s32.totalorder %s16, 1
        %s136 = scalar_select %p135, %s16, 1
        %s137 = smul.addr %s136, 8
        %s138 = scalar_lea.vmem %s0, %s137
        %v139 = vld [vmem:[%s138] sm:$0xff]
        %140 = vxpose.xlu0.b32.start [1/16] %v139, 128
        %141 = vxpose.xlu0.b32.cont [2/16] 0.0, 128
        %142 = vxpose.xlu0.b32.cont [3/16] 0.0, 128
        %143 = vxpose.xlu0.b32.cont [4/16] 0.0, 128
        %144 = vxpose.xlu0.b32.cont [5/16] 0.0, 128
        %145 = vxpose.xlu0.b32.cont [6/16] 0.0, 128
        %146 = vxpose.xlu0.b32.cont [7/16] 0.0, 128
        %147 = vxpose.xlu0.b32.cont [8/16] 0.0, 128
        %148 = vxpose.xlu0.b32.cont [9/16] 0.0, 128
        %149 = vxpose.xlu0.b32.cont [10/16] 0.0, 128
        %150 = vxpose.xlu0.b32.cont [11/16] 0.0, 128
        %151 = vxpose.xlu0.b32.cont [12/16] 0.0, 128
        %152 = vxpose.xlu0.b32.cont [13/16] 0.0, 128
        %153 = vxpose.xlu0.b32.cont [14/16] 0.0, 128
        %154 = vxpose.xlu0.b32.cont [15/16] 0.0, 128
        %155 = vxpose.xlu0.b32.end [16/16] 0.0, 128
        %v156 = vpop.trf.xlu0
        %v157 = vpop.trf.xlu0
        %v158 = vpop.trf.xlu0
        %v159 = vpop.trf.xlu0
        %v160 = vpop.trf.xlu0
        %v161 = vpop.trf.xlu0
        %v162 = vpop.trf.xlu0
        %v163 = vpop.trf.xlu0
        %v164 = vpop.trf.xlu0
        %v165 = vpop.trf.xlu0
        %v166 = vpop.trf.xlu0
        %v167 = vpop.trf.xlu0
        %v168 = vpop.trf.xlu0
        %v169 = vpop.trf.xlu0
        %v170 = vpop.trf.xlu0
        %v171 = vpop.trf.xlu0
        %v172 = vld [vmem:[%s1] sm:$0xff]
        %v173 = vld [vmem:[%s1 + $0x8] sm:$0xff]
        %v174 = vld [vmem:[%s1 + $0x10] sm:$0xff]
        %v175 = vld [vmem:[%s1 + $0x18] sm:$0xff]
        %v176 = vld [vmem:[%s1 + $0x20] sm:$0xff]
        %v177 = vld [vmem:[%s1 + $0x28] sm:$0xff]
        %v178 = vld [vmem:[%s1 + $0x30] sm:$0xff]
        %v179 = vld [vmem:[%s1 + $0x38] sm:$0xff]
        %v180 = vld [vmem:[%s1 + $0x40] sm:$0xff]
        %v181 = vld [vmem:[%s1 + $0x48] sm:$0xff]
        %v182 = vld [vmem:[%s1 + $0x50] sm:$0xff]
        %v183 = vld [vmem:[%s1 + $0x58] sm:$0xff]
        %v184 = vld [vmem:[%s1 + $0x60] sm:$0xff]
        %v185 = vld [vmem:[%s1 + $0x68] sm:$0xff]
        %v186 = vld [vmem:[%s1 + $0x70] sm:$0xff]
        %v187 = vld [vmem:[%s1 + $0x78] sm:$0xff]
        %v188 = vld [vmem:[%s1 + $0x80] sm:$0xff]
        %v189 = vld [vmem:[%s1 + $0x88] sm:$0xff]
        %v190 = vld [vmem:[%s1 + $0x90] sm:$0xff]
        %v191 = vld [vmem:[%s1 + $0x98] sm:$0xff]
        %v192 = vld [vmem:[%s1 + $0xa0] sm:$0xff]
        %v193 = vld [vmem:[%s1 + $0xa8] sm:$0xff]
        %v194 = vld [vmem:[%s1 + $0xb0] sm:$0xff]
        %v195 = vld [vmem:[%s1 + $0xb8] sm:$0xff]
        %v196 = vld [vmem:[%s1 + $0xc0] sm:$0xff]
        %v197 = vld [vmem:[%s1 + $0xc8] sm:$0xff]
        %v198 = vld [vmem:[%s1 + $0xd0] sm:$0xff]
        %v199 = vld [vmem:[%s1 + $0xd8] sm:$0xff]
        %v200 = vld [vmem:[%s1 + $0xe0] sm:$0xff]
        %v201 = vld [vmem:[%s1 + $0xe8] sm:$0xff]
        %v202 = vld [vmem:[%s1 + $0xf0] sm:$0xff]
        %v203 = vld [vmem:[%s1 + $0xf8] sm:$0xff]
        %v204 = vld [vmem:[%s1 + $0x100] sm:$0xff]
        %v205 = vld [vmem:[%s1 + $0x108] sm:$0xff]
        %v206 = vld [vmem:[%s1 + $0x110] sm:$0xff]
        %v207 = vld [vmem:[%s1 + $0x118] sm:$0xff]
        %v208 = vld [vmem:[%s1 + $0x120] sm:$0xff]
        %v209 = vld [vmem:[%s1 + $0x128] sm:$0xff]
        %v210 = vld [vmem:[%s1 + $0x130] sm:$0xff]
        %v211 = vld [vmem:[%s1 + $0x138] sm:$0xff]
        %v212 = vld [vmem:[%s1 + $0x140] sm:$0xff]
        %v213 = vld [vmem:[%s1 + $0x148] sm:$0xff]
        %v214 = vld [vmem:[%s1 + $0x150] sm:$0xff]
        %v215 = vld [vmem:[%s1 + $0x158] sm:$0xff]
        %v216 = vld [vmem:[%s1 + $0x160] sm:$0xff]
        %v217 = vld [vmem:[%s1 + $0x168] sm:$0xff]
        %v218 = vld [vmem:[%s1 + $0x170] sm:$0xff]
        %v219 = vld [vmem:[%s1 + $0x178] sm:$0xff]
        %v220 = vld [vmem:[%s1 + $0x180] sm:$0xff]
        %v221 = vld [vmem:[%s1 + $0x188] sm:$0xff]
        %v222 = vld [vmem:[%s1 + $0x190] sm:$0xff]
        %v223 = vld [vmem:[%s1 + $0x198] sm:$0xff]
        %v224 = vld [vmem:[%s1 + $0x1a0] sm:$0xff]
        %v225 = vld [vmem:[%s1 + $0x1a8] sm:$0xff]
        %v226 = vld [vmem:[%s1 + $0x1b0] sm:$0xff]
        %v227 = vld [vmem:[%s1 + $0x1b8] sm:$0xff]
        %vm228 = vcmask 531456
        %v230 = vsel %vm228, %v172, 0
        %v233 = vsel %vm228, %v173, 0
        %v236 = vsel %vm228, %v174, 0
        %v239 = vsel %vm228, %v175, 0
        %v242 = vsel %vm228, %v176, 0
        %v245 = vsel %vm228, %v177, 0
        %v248 = vsel %vm228, %v178, 0
        %v251 = vsel %vm228, %v179, 0
        %v254 = vsel %vm228, %v180, 0
        %v257 = vsel %vm228, %v181, 0
        %v260 = vsel %vm228, %v182, 0
        %v263 = vsel %vm228, %v183, 0
        %v266 = vsel %vm228, %v184, 0
        %v269 = vsel %vm228, %v185, 0
        %v272 = vsel %vm228, %v186, 0
        %v275 = vsel %vm228, %v187, 0
        %v278 = vsel %vm228, %v188, 0
        %v281 = vsel %vm228, %v189, 0
        %v284 = vsel %vm228, %v190, 0
        %v287 = vsel %vm228, %v191, 0
        %v290 = vsel %vm228, %v192, 0
        %v293 = vsel %vm228, %v193, 0
        %v296 = vsel %vm228, %v194, 0
        %v299 = vsel %vm228, %v195, 0
        %v302 = vsel %vm228, %v196, 0
        %v305 = vsel %vm228, %v197, 0
        %v308 = vsel %vm228, %v198, 0
        %v311 = vsel %vm228, %v199, 0
        %v314 = vsel %vm228, %v200, 0
        %v317 = vsel %vm228, %v201, 0
        %v320 = vsel %vm228, %v202, 0
        %v323 = vsel %vm228, %v203, 0
        %v326 = vsel %vm228, %v204, 0
        %v329 = vsel %vm228, %v205, 0
        %v332 = vsel %vm228, %v206, 0
        %v335 = vsel %vm228, %v207, 0
        %v338 = vsel %vm228, %v208, 0
        %v341 = vsel %vm228, %v209, 0
        %v344 = vsel %vm228, %v210, 0
        %v347 = vsel %vm228, %v211, 0
        %v350 = vsel %vm228, %v212, 0
        %v353 = vsel %vm228, %v213, 0
        %v356 = vsel %vm228, %v214, 0
        %v359 = vsel %vm228, %v215, 0
        %v362 = vsel %vm228, %v216, 0
        %v365 = vsel %vm228, %v217, 0
        %v368 = vsel %vm228, %v218, 0
        %v371 = vsel %vm228, %v219, 0
        %v374 = vsel %vm228, %v220, 0
        %v377 = vsel %vm228, %v221, 0
        %v380 = vsel %vm228, %v222, 0
        %v383 = vsel %vm228, %v223, 0
        %v386 = vsel %vm228, %v224, 0
        %v389 = vsel %vm228, %v225, 0
        %v392 = vsel %vm228, %v226, 0
        %v395 = vsel %vm228, %v227, 0
        %vm397 = vcmask 1040384
        %v399 = vsel %vm397, 1.0, 0
        %401 = vmatprep.subr.mxu0 0.0
        %402 = vmatpush1.msra.mxu0 %v156
        %403 = vmatprep.subr.mxu0 0.0
        %404 = vmatpush1.msra.mxu0 %v157
        %405 = vmatprep.subr.mxu0 0.0
        %406 = vmatpush1.msra.mxu0 %v158
        %407 = vmatprep.subr.mxu0 0.0
        %408 = vmatpush1.msra.mxu0 %v159
        %409 = vmatprep.subr.mxu0 0.0
        %410 = vmatpush1.msra.mxu0 %v160
        %411 = vmatprep.subr.mxu0 0.0
        %412 = vmatpush1.msra.mxu0 %v161
        %413 = vmatprep.subr.mxu0 0.0
        %414 = vmatpush1.msra.mxu0 %v162
        %415 = vmatprep.subr.mxu0 0.0
        %416 = vmatpush1.msra.mxu0 %v163
        %417 = vmatprep.subr.mxu0 0.0
        %418 = vmatpush1.msra.mxu0 %v399
        %419 = vmatprep.subr.mxu0 0.0
        %420 = vmatpush1.msra.mxu0 0.0
        %421 = vmatprep.subr.mxu0 0.0
        %422 = vmatpush1.msra.mxu0 0.0
        %423 = vmatprep.subr.mxu0 0.0
        %424 = vmatpush1.msra.mxu0 0.0
        %425 = vmatprep.subr.mxu0 0.0
        %426 = vmatpush1.msra.mxu0 0.0
        %427 = vmatprep.subr.mxu0 0.0
        %428 = vmatpush1.msra.mxu0 0.0
        %429 = vmatprep.subr.mxu0 0.0
        %430 = vmatpush1.msra.mxu0 0.0
        %431 = vmatprep.subr.mxu0 0.0
        %432 = vmatpush1.msra.mxu0 0.0
        %433 = vmatprep.subr.mxu0 0.0
        %434 = vmatpush1.msra.mxu0 0.0
        %435 = vmatprep.subr.mxu0 0.0
        %436 = vmatpush1.msra.mxu0 0.0
        %437 = vmatprep.subr.mxu0 0.0
        %438 = vmatpush1.msra.mxu0 0.0
        %439 = vmatprep.subr.mxu0 0.0
        %440 = vmatpush1.msra.mxu0 0.0
        %441 = vmatprep.subr.mxu0 0.0
        %442 = vmatpush1.msra.mxu0 0.0
        %443 = vmatprep.subr.mxu0 0.0
        %444 = vmatpush1.msra.mxu0 0.0
        %445 = vmatprep.subr.mxu0 0.0
        %446 = vmatpush1.msra.mxu0 0.0
        %447 = vmatprep.subr.mxu0 0.0
        %448 = vmatpush1.msra.mxu0 0.0
        %449 = vmatprep.subr.mxu0 0.0
        %450 = vmatpush1.msra.mxu0 0.0
        %451 = vmatprep.subr.mxu0 0.0
        %452 = vmatpush1.msra.mxu0 0.0
        %453 = vmatprep.subr.mxu0 0.0
        %454 = vmatpush1.msra.mxu0 0.0
        %455 = vmatprep.subr.mxu0 0.0
        %456 = vmatpush1.msra.mxu0 0.0
        %457 = vmatprep.subr.mxu0 0.0
        %458 = vmatpush1.msra.mxu0 0.0
        %459 = vmatprep.subr.mxu0 0.0
        %460 = vmatpush1.msra.mxu0 0.0
        %461 = vmatprep.subr.mxu0 0.0
        %462 = vmatpush1.msra.mxu0 0.0
        %463 = vmatprep.subr.mxu0 0.0
        %464 = vmatpush1.msra.mxu0 0.0
        %465 = vmatprep.mubr.f32.mxu0 0.0
        %466 = vmatmul.mubr.f32.gmra.mrb[0].mxu0 %v230
        %v467 = vpop.f32.mrb[0].mxu0
        %v468 = vadd.f32 0.0, %v467
        %v469 = vpop.f32.mrb[0].mxu0
        %470 = vmatprep.mubr.f32.mxu0 0.0
        %471 = vmatmul.mubr.f32.gmra.mrb[0].mxu0 %v233
        %v472 = vpop.f32.mrb[0].mxu0
        %v473 = vadd.f32 0.0, %v472
        %v474 = vpop.f32.mrb[0].mxu0
        %475 = vmatprep.mubr.f32.mxu0 0.0
        %476 = vmatmul.mubr.f32.gmra.mrb[0].mxu0 %v236
        %v477 = vpop.f32.mrb[0].mxu0
        %v478 = vadd.f32 0.0, %v477
        %v479 = vpop.f32.mrb[0].mxu0
        %480 = vmatprep.mubr.f32.mxu0 0.0
        %481 = vmatmul.mubr.f32.gmra.mrb[0].mxu0 %v239
        %v482 = vpop.f32.mrb[0].mxu0
        %v483 = vadd.f32 0.0, %v482
        %v484 = vpop.f32.mrb[0].mxu0
        %485 = vmatprep.mubr.f32.mxu0 0.0
        %486 = vmatmul.mubr.f32.gmra.mrb[0].mxu0 %v242
        %v487 = vpop.f32.mrb[0].mxu0
        %v488 = vadd.f32 0.0, %v487
        %v489 = vpop.f32.mrb[0].mxu0
        %490 = vmatprep.mubr.f32.mxu0 0.0
        %491 = vmatmul.mubr.f32.gmra.mrb[0].mxu0 %v245
        %v492 = vpop.f32.mrb[0].mxu0
        %v493 = vadd.f32 0.0, %v492
        %v494 = vpop.f32.mrb[0].mxu0
        %495 = vmatprep.mubr.f32.mxu0 0.0
        %496 = vmatmul.mubr.f32.gmra.mrb[0].mxu0 %v248
        %v497 = vpop.f32.mrb[0].mxu0
        %v498 = vadd.f32 0.0, %v497
        %v499 = vpop.f32.mrb[0].mxu0
        %500 = vmatprep.mubr.f32.mxu0 0.0
        %501 = vmatmul.mubr.f32.gmra.mrb[0].mxu0 %v251
        %v502 = vpop.f32.mrb[0].mxu0
        %v503 = vadd.f32 0.0, %v502
        %v504 = vpop.f32.mrb[0].mxu0
        %505 = vmatprep.mubr.f32.mxu0 0.0
        %506 = vmatmul.mubr.f32.gmra.mrb[0].mxu0 %v254
        %v507 = vpop.f32.mrb[0].mxu0
        %v508 = vadd.f32 0.0, %v507
        %v509 = vpop.f32.mrb[0].mxu0
        %510 = vmatprep.mubr.f32.mxu0 0.0
        %511 = vmatmul.mubr.f32.gmra.mrb[0].mxu0 %v257
        %v512 = vpop.f32.mrb[0].mxu0
        %v513 = vadd.f32 0.0, %v512
        %v514 = vpop.f32.mrb[0].mxu0
        %515 = vmatprep.mubr.f32.mxu0 0.0
        %516 = vmatmul.mubr.f32.gmra.mrb[0].mxu0 %v260
        %v517 = vpop.f32.mrb[0].mxu0
        %v518 = vadd.f32 0.0, %v517
        %v519 = vpop.f32.mrb[0].mxu0
        %520 = vmatprep.mubr.f32.mxu0 0.0
        %521 = vmatmul.mubr.f32.gmra.mrb[0].mxu0 %v263
        %v522 = vpop.f32.mrb[0].mxu0
        %v523 = vadd.f32 0.0, %v522
        %v524 = vpop.f32.mrb[0].mxu0
        %525 = vmatprep.mubr.f32.mxu0 0.0
        %526 = vmatmul.mubr.f32.gmra.mrb[0].mxu0 %v266
        %v527 = vpop.f32.mrb[0].mxu0
        %v528 = vadd.f32 0.0, %v527
        %v529 = vpop.f32.mrb[0].mxu0
        %530 = vmatprep.mubr.f32.mxu0 0.0
        %531 = vmatmul.mubr.f32.gmra.mrb[0].mxu0 %v269
        %v532 = vpop.f32.mrb[0].mxu0
        %v533 = vadd.f32 0.0, %v532
        %v534 = vpop.f32.mrb[0].mxu0
        %535 = vmatprep.mubr.f32.mxu0 0.0
        %536 = vmatmul.mubr.f32.gmra.mrb[0].mxu0 %v272
        %v537 = vpop.f32.mrb[0].mxu0
        %v538 = vadd.f32 0.0, %v537
        %v539 = vpop.f32.mrb[0].mxu0
        %540 = vmatprep.mubr.f32.mxu0 0.0
        %541 = vmatmul.mubr.f32.gmra.mrb[0].mxu0 %v275
        %v542 = vpop.f32.mrb[0].mxu0
        %v543 = vadd.f32 0.0, %v542
        %v544 = vpop.f32.mrb[0].mxu0
        %545 = vmatprep.mubr.f32.mxu0 0.0
        %546 = vmatmul.mubr.f32.gmra.mrb[0].mxu0 %v278
        %v547 = vpop.f32.mrb[0].mxu0
        %v548 = vadd.f32 0.0, %v547
        %v549 = vpop.f32.mrb[0].mxu0
        %550 = vmatprep.mubr.f32.mxu0 0.0
        %551 = vmatmul.mubr.f32.gmra.mrb[0].mxu0 %v281
        %v552 = vpop.f32.mrb[0].mxu0
        %v553 = vadd.f32 0.0, %v552
        %v554 = vpop.f32.mrb[0].mxu0
        %555 = vmatprep.mubr.f32.mxu0 0.0
        %556 = vmatmul.mubr.f32.gmra.mrb[0].mxu0 %v284
        %v557 = vpop.f32.mrb[0].mxu0
        %v558 = vadd.f32 0.0, %v557
        %v559 = vpop.f32.mrb[0].mxu0
        %560 = vmatprep.mubr.f32.mxu0 0.0
        %561 = vmatmul.mubr.f32.gmra.mrb[0].mxu0 %v287
        %v562 = vpop.f32.mrb[0].mxu0
        %v563 = vadd.f32 0.0, %v562
        %v564 = vpop.f32.mrb[0].mxu0
        %565 = vmatprep.mubr.f32.mxu0 0.0
        %566 = vmatmul.mubr.f32.gmra.mrb[0].mxu0 %v290
        %v567 = vpop.f32.mrb[0].mxu0
        %v568 = vadd.f32 0.0, %v567
        %v569 = vpop.f32.mrb[0].mxu0
        %570 = vmatprep.mubr.f32.mxu0 0.0
        %571 = vmatmul.mubr.f32.gmra.mrb[0].mxu0 %v293
        %v572 = vpop.f32.mrb[0].mxu0
        %v573 = vadd.f32 0.0, %v572
        %v574 = vpop.f32.mrb[0].mxu0
        %575 = vmatprep.mubr.f32.mxu0 0.0
        %576 = vmatmul.mubr.f32.gmra.mrb[0].mxu0 %v296
        %v577 = vpop.f32.mrb[0].mxu0
        %v578 = vadd.f32 0.0, %v577
        %v579 = vpop.f32.mrb[0].mxu0
        %580 = vmatprep.mubr.f32.mxu0 0.0
        %581 = vmatmul.mubr.f32.gmra.mrb[0].mxu0 %v299
        %v582 = vpop.f32.mrb[0].mxu0
        %v583 = vadd.f32 0.0, %v582
        %v584 = vpop.f32.mrb[0].mxu0
        %585 = vmatprep.mubr.f32.mxu0 0.0
        %586 = vmatmul.mubr.f32.gmra.mrb[0].mxu0 %v302
        %v587 = vpop.f32.mrb[0].mxu0
        %v588 = vadd.f32 0.0, %v587
        %v589 = vpop.f32.mrb[0].mxu0
        %590 = vmatprep.mubr.f32.mxu0 0.0
        %591 = vmatmul.mubr.f32.gmra.mrb[0].mxu0 %v305
        %v592 = vpop.f32.mrb[0].mxu0
        %v593 = vadd.f32 0.0, %v592
        %v594 = vpop.f32.mrb[0].mxu0
        %595 = vmatprep.mubr.f32.mxu0 0.0
        %596 = vmatmul.mubr.f32.gmra.mrb[0].mxu0 %v308
        %v597 = vpop.f32.mrb[0].mxu0
        %v598 = vadd.f32 0.0, %v597
        %v599 = vpop.f32.mrb[0].mxu0
        %600 = vmatprep.mubr.f32.mxu0 0.0
        %601 = vmatmul.mubr.f32.gmra.mrb[0].mxu0 %v311
        %v602 = vpop.f32.mrb[0].mxu0
        %v603 = vadd.f32 0.0, %v602
        %v604 = vpop.f32.mrb[0].mxu0
        %605 = vmatprep.mubr.f32.mxu0 0.0
        %606 = vmatmul.mubr.f32.gmra.mrb[0].mxu0 %v314
        %v607 = vpop.f32.mrb[0].mxu0
        %v608 = vadd.f32 0.0, %v607
        %v609 = vpop.f32.mrb[0].mxu0
        %610 = vmatprep.mubr.f32.mxu0 0.0
        %611 = vmatmul.mubr.f32.gmra.mrb[0].mxu0 %v317
        %v612 = vpop.f32.mrb[0].mxu0
        %v613 = vadd.f32 0.0, %v612
        %v614 = vpop.f32.mrb[0].mxu0
        %615 = vmatprep.mubr.f32.mxu0 0.0
        %616 = vmatmul.mubr.f32.gmra.mrb[0].mxu0 %v320
        %v617 = vpop.f32.mrb[0].mxu0
        %v618 = vadd.f32 0.0, %v617
        %v619 = vpop.f32.mrb[0].mxu0
        %620 = vmatprep.mubr.f32.mxu0 0.0
        %621 = vmatmul.mubr.f32.gmra.mrb[0].mxu0 %v323
        %v622 = vpop.f32.mrb[0].mxu0
        %v623 = vadd.f32 0.0, %v622
        %v624 = vpop.f32.mrb[0].mxu0
        %625 = vmatprep.mubr.f32.mxu0 0.0
        %626 = vmatmul.mubr.f32.gmra.mrb[0].mxu0 %v326
        %v627 = vpop.f32.mrb[0].mxu0
        %v628 = vadd.f32 0.0, %v627
        %v629 = vpop.f32.mrb[0].mxu0
        %630 = vmatprep.mubr.f32.mxu0 0.0
        %631 = vmatmul.mubr.f32.gmra.mrb[0].mxu0 %v329
        %v632 = vpop.f32.mrb[0].mxu0
        %v633 = vadd.f32 0.0, %v632
        %v634 = vpop.f32.mrb[0].mxu0
        %635 = vmatprep.mubr.f32.mxu0 0.0
        %636 = vmatmul.mubr.f32.gmra.mrb[0].mxu0 %v332
        %v637 = vpop.f32.mrb[0].mxu0
        %v638 = vadd.f32 0.0, %v637
        %v639 = vpop.f32.mrb[0].mxu0
        %640 = vmatprep.mubr.f32.mxu0 0.0
        %641 = vmatmul.mubr.f32.gmra.mrb[0].mxu0 %v335
        %v642 = vpop.f32.mrb[0].mxu0
        %v643 = vadd.f32 0.0, %v642
        %v644 = vpop.f32.mrb[0].mxu0
        %645 = vmatprep.mubr.f32.mxu0 0.0
        %646 = vmatmul.mubr.f32.gmra.mrb[0].mxu0 %v338
        %v647 = vpop.f32.mrb[0].mxu0
        %v648 = vadd.f32 0.0, %v647
        %v649 = vpop.f32.mrb[0].mxu0
        %650 = vmatprep.mubr.f32.mxu0 0.0
        %651 = vmatmul.mubr.f32.gmra.mrb[0].mxu0 %v341
        %v652 = vpop.f32.mrb[0].mxu0
        %v653 = vadd.f32 0.0, %v652
        %v654 = vpop.f32.mrb[0].mxu0
        %655 = vmatprep.mubr.f32.mxu0 0.0
        %656 = vmatmul.mubr.f32.gmra.mrb[0].mxu0 %v344
        %v657 = vpop.f32.mrb[0].mxu0
        %v658 = vadd.f32 0.0, %v657
        %v659 = vpop.f32.mrb[0].mxu0
        %660 = vmatprep.mubr.f32.mxu0 0.0
        %661 = vmatmul.mubr.f32.gmra.mrb[0].mxu0 %v347
        %v662 = vpop.f32.mrb[0].mxu0
        %v663 = vadd.f32 0.0, %v662
        %v664 = vpop.f32.mrb[0].mxu0
        %665 = vmatprep.mubr.f32.mxu0 0.0
        %666 = vmatmul.mubr.f32.gmra.mrb[0].mxu0 %v350
        %v667 = vpop.f32.mrb[0].mxu0
        %v668 = vadd.f32 0.0, %v667
        %v669 = vpop.f32.mrb[0].mxu0
        %670 = vmatprep.mubr.f32.mxu0 0.0
        %671 = vmatmul.mubr.f32.gmra.mrb[0].mxu0 %v353
        %v672 = vpop.f32.mrb[0].mxu0
        %v673 = vadd.f32 0.0, %v672
        %v674 = vpop.f32.mrb[0].mxu0
        %675 = vmatprep.mubr.f32.mxu0 0.0
        %676 = vmatmul.mubr.f32.gmra.mrb[0].mxu0 %v356
        %v677 = vpop.f32.mrb[0].mxu0
        %v678 = vadd.f32 0.0, %v677
        %v679 = vpop.f32.mrb[0].mxu0
        %680 = vmatprep.mubr.f32.mxu0 0.0
        %681 = vmatmul.mubr.f32.gmra.mrb[0].mxu0 %v359
        %v682 = vpop.f32.mrb[0].mxu0
        %v683 = vadd.f32 0.0, %v682
        %v684 = vpop.f32.mrb[0].mxu0
        %685 = vmatprep.mubr.f32.mxu0 0.0
        %686 = vmatmul.mubr.f32.gmra.mrb[0].mxu0 %v362
        %v687 = vpop.f32.mrb[0].mxu0
        %v688 = vadd.f32 0.0, %v687
        %v689 = vpop.f32.mrb[0].mxu0
        %690 = vmatprep.mubr.f32.mxu0 0.0
        %691 = vmatmul.mubr.f32.gmra.mrb[0].mxu0 %v365
        %v692 = vpop.f32.mrb[0].mxu0
        %v693 = vadd.f32 0.0, %v692
        %v694 = vpop.f32.mrb[0].mxu0
        %695 = vmatprep.mubr.f32.mxu0 0.0
        %696 = vmatmul.mubr.f32.gmra.mrb[0].mxu0 %v368
        %v697 = vpop.f32.mrb[0].mxu0
        %v698 = vadd.f32 0.0, %v697
        %v699 = vpop.f32.mrb[0].mxu0
        %700 = vmatprep.mubr.f32.mxu0 0.0
        %701 = vmatmul.mubr.f32.gmra.mrb[0].mxu0 %v371
        %v702 = vpop.f32.mrb[0].mxu0
        %v703 = vadd.f32 0.0, %v702
        %v704 = vpop.f32.mrb[0].mxu0
        %705 = vmatprep.mubr.f32.mxu0 0.0
        %706 = vmatmul.mubr.f32.gmra.mrb[0].mxu0 %v374
        %v707 = vpop.f32.mrb[0].mxu0
        %v708 = vadd.f32 0.0, %v707
        %v709 = vpop.f32.mrb[0].mxu0
        %710 = vmatprep.mubr.f32.mxu0 0.0
        %711 = vmatmul.mubr.f32.gmra.mrb[0].mxu0 %v377
        %v712 = vpop.f32.mrb[0].mxu0
        %v713 = vadd.f32 0.0, %v712
        %v714 = vpop.f32.mrb[0].mxu0
        %715 = vmatprep.mubr.f32.mxu0 0.0
        %716 = vmatmul.mubr.f32.gmra.mrb[0].mxu0 %v380
        %v717 = vpop.f32.mrb[0].mxu0
        %v718 = vadd.f32 0.0, %v717
        %v719 = vpop.f32.mrb[0].mxu0
        %720 = vmatprep.mubr.f32.mxu0 0.0
        %721 = vmatmul.mubr.f32.gmra.mrb[0].mxu0 %v383
        %v722 = vpop.f32.mrb[0].mxu0
        %v723 = vadd.f32 0.0, %v722
        %v724 = vpop.f32.mrb[0].mxu0
        %725 = vmatprep.mubr.f32.mxu0 0.0
        %726 = vmatmul.mubr.f32.gmra.mrb[0].mxu0 %v386
        %v727 = vpop.f32.mrb[0].mxu0
        %v728 = vadd.f32 0.0, %v727
        %v729 = vpop.f32.mrb[0].mxu0
        %730 = vmatprep.mubr.f32.mxu0 0.0
        %731 = vmatmul.mubr.f32.gmra.mrb[0].mxu0 %v389
        %v732 = vpop.f32.mrb[0].mxu0
        %v733 = vadd.f32 0.0, %v732
        %v734 = vpop.f32.mrb[0].mxu0
        %735 = vmatprep.mubr.f32.mxu0 0.0
        %736 = vmatmul.mubr.f32.gmra.mrb[0].mxu0 %v392
        %v737 = vpop.f32.mrb[0].mxu0
        %v738 = vadd.f32 0.0, %v737
        %v739 = vpop.f32.mrb[0].mxu0
        %740 = vmatprep.mubr.f32.mxu0 0.0
        %741 = vmatmul.mubr.f32.gmra.mrb[0].mxu0 %v395
        %v742 = vpop.f32.mrb[0].mxu0
        %v743 = vadd.f32 0.0, %v742
        %v744 = vpop.f32.mrb[0].mxu0
        %745 = vdwg.mxu0
        %vm746 = vcmask 64512
        %v747 = vsel %vm746, %v468, -inf
        %v748 = vsel %vm746, %v473, -inf
        %v749 = vsel %vm746, %v478, -inf
        %v750 = vsel %vm746, %v483, -inf
        %v751 = vmax.f32 %v747, %v748
        %v752 = vmax.f32 %v749, %v750
        %v753 = vmax.f32 %v751, %v752
        %v754 = vrot.slane %v753, 4
        %v755 = vmax.f32 %v753, %v754
        %v756 = vrot.slane %v755, 2
        %v757 = vmax.f32 %v755, %v756
        %v758 = vrot.slane %v757, 1
        %v759 = vmax.f32 %v757, %v758
        %vm760 = vcmask 57344
        %761 = vst.msk [vmem:[#allocation2] sm:$0x1] %vm760, %v759
        %v762 = vsel %vm746, %v488, -inf
        %v763 = vsel %vm746, %v493, -inf
        %v764 = vsel %vm746, %v498, -inf
        %v765 = vsel %vm746, %v503, -inf
        %v766 = vmax.f32 %v762, %v763
        %v767 = vmax.f32 %v764, %v765
        %v768 = vmax.f32 %v766, %v767
        %v769 = vrot.slane %v768, 4
        %v770 = vmax.f32 %v768, %v769
        %v771 = vrot.slane %v770, 2
        %v772 = vmax.f32 %v770, %v771
        %v773 = vrot.slane %v772, 1
        %v774 = vmax.f32 %v772, %v773
        %775 = vst.msk [vmem:[#allocation2 + $0x1] sm:$0x1] %vm760, %v774
        %v776 = vsel %vm746, %v508, -inf
        %v777 = vsel %vm746, %v513, -inf
        %v778 = vsel %vm746, %v518, -inf
        %v779 = vsel %vm746, %v523, -inf
        %v780 = vmax.f32 %v776, %v777
        %v781 = vmax.f32 %v778, %v779
        %v782 = vmax.f32 %v780, %v781
        %v783 = vrot.slane %v782, 4
        %v784 = vmax.f32 %v782, %v783
        %v785 = vrot.slane %v784, 2
        %v786 = vmax.f32 %v784, %v785
        %v787 = vrot.slane %v786, 1
        %v788 = vmax.f32 %v786, %v787
        %789 = vst.msk [vmem:[#allocation2 + $0x2] sm:$0x1] %vm760, %v788
        %v790 = vsel %vm746, %v528, -inf
        %v791 = vsel %vm746, %v533, -inf
        %v792 = vsel %vm746, %v538, -inf
        %v793 = vsel %vm746, %v543, -inf
        %v794 = vmax.f32 %v790, %v791
        %v795 = vmax.f32 %v792, %v793
        %v796 = vmax.f32 %v794, %v795
        %v797 = vrot.slane %v796, 4
        %v798 = vmax.f32 %v796, %v797
        %v799 = vrot.slane %v798, 2
        %v800 = vmax.f32 %v798, %v799
        %v801 = vrot.slane %v800, 1
        %v802 = vmax.f32 %v800, %v801
        %803 = vst.msk [vmem:[#allocation2 + $0x3] sm:$0x1] %vm760, %v802
        %v804 = vsel %vm746, %v548, -inf
        %v805 = vsel %vm746, %v553, -inf
        %v806 = vsel %vm746, %v558, -inf
        %v807 = vsel %vm746, %v563, -inf
        %v808 = vmax.f32 %v804, %v805
        %v809 = vmax.f32 %v806, %v807
        %v810 = vmax.f32 %v808, %v809
        %v811 = vrot.slane %v810, 4
        %v812 = vmax.f32 %v810, %v811
        %v813 = vrot.slane %v812, 2
        %v814 = vmax.f32 %v812, %v813
        %v815 = vrot.slane %v814, 1
        %v816 = vmax.f32 %v814, %v815
        %817 = vst.msk [vmem:[#allocation2 + $0x4] sm:$0x1] %vm760, %v816
        %v818 = vsel %vm746, %v568, -inf
        %v819 = vsel %vm746, %v573, -inf
        %v820 = vsel %vm746, %v578, -inf
        %v821 = vsel %vm746, %v583, -inf
        %v822 = vmax.f32 %v818, %v819
        %v823 = vmax.f32 %v820, %v821
        %v824 = vmax.f32 %v822, %v823
        %v825 = vrot.slane %v824, 4
        %v826 = vmax.f32 %v824, %v825
        %v827 = vrot.slane %v826, 2
        %v828 = vmax.f32 %v826, %v827
        %v829 = vrot.slane %v828, 1
        %v830 = vmax.f32 %v828, %v829
        %831 = vst.msk [vmem:[#allocation2 + $0x5] sm:$0x1] %vm760, %v830
        %v832 = vsel %vm746, %v588, -inf
        %v833 = vsel %vm746, %v593, -inf
        %v834 = vsel %vm746, %v598, -inf
        %v835 = vsel %vm746, %v603, -inf
        %v836 = vmax.f32 %v832, %v833
        %v837 = vmax.f32 %v834, %v835
        %v838 = vmax.f32 %v836, %v837
        %v839 = vrot.slane %v838, 4
        %v840 = vmax.f32 %v838, %v839
        %v841 = vrot.slane %v840, 2
        %v842 = vmax.f32 %v840, %v841
        %v843 = vrot.slane %v842, 1
        %v844 = vmax.f32 %v842, %v843
        %845 = vst.msk [vmem:[#allocation2 + $0x6] sm:$0x1] %vm760, %v844
        %v846 = vsel %vm746, %v608, -inf
        %v847 = vsel %vm746, %v613, -inf
        %v848 = vsel %vm746, %v618, -inf
        %v849 = vsel %vm746, %v623, -inf
        %v850 = vmax.f32 %v846, %v847
        %v851 = vmax.f32 %v848, %v849
        %v852 = vmax.f32 %v850, %v851
        %v853 = vrot.slane %v852, 4
        %v854 = vmax.f32 %v852, %v853
        %v855 = vrot.slane %v854, 2
        %v856 = vmax.f32 %v854, %v855
        %v857 = vrot.slane %v856, 1
        %v858 = vmax.f32 %v856, %v857
        %859 = vst.msk [vmem:[#allocation2 + $0x7] sm:$0x1] %vm760, %v858
        %v860 = vsel %vm746, %v628, -inf
        %v861 = vsel %vm746, %v633, -inf
        %v862 = vsel %vm746, %v638, -inf
        %v863 = vsel %vm746, %v643, -inf
        %v864 = vmax.f32 %v860, %v861
        %v865 = vmax.f32 %v862, %v863
        %v866 = vmax.f32 %v864, %v865
        %v867 = vrot.slane %v866, 4
        %v868 = vmax.f32 %v866, %v867
        %v869 = vrot.slane %v868, 2
        %v870 = vmax.f32 %v868, %v869
        %v871 = vrot.slane %v870, 1
        %v872 = vmax.f32 %v870, %v871
        %873 = vst.msk [vmem:[#allocation2 + $0x10] sm:$0x1] %vm760, %v872
        %v874 = vsel %vm746, %v648, -inf
        %v875 = vsel %vm746, %v653, -inf
        %v876 = vsel %vm746, %v658, -inf
        %v877 = vsel %vm746, %v663, -inf
        %v878 = vmax.f32 %v874, %v875
        %v879 = vmax.f32 %v876, %v877
        %v880 = vmax.f32 %v878, %v879
        %v881 = vrot.slane %v880, 4
        %v882 = vmax.f32 %v880, %v881
        %v883 = vrot.slane %v882, 2
        %v884 = vmax.f32 %v882, %v883
        %v885 = vrot.slane %v884, 1
        %v886 = vmax.f32 %v884, %v885
        %887 = vst.msk [vmem:[#allocation2 + $0x11] sm:$0x1] %vm760, %v886
        %v888 = vsel %vm746, %v668, -inf
        %v889 = vsel %vm746, %v673, -inf
        %v890 = vsel %vm746, %v678, -inf
        %v891 = vsel %vm746, %v683, -inf
        %v892 = vmax.f32 %v888, %v889
        %v893 = vmax.f32 %v890, %v891
        %v894 = vmax.f32 %v892, %v893
        %v895 = vrot.slane %v894, 4
        %v896 = vmax.f32 %v894, %v895
        %v897 = vrot.slane %v896, 2
        %v898 = vmax.f32 %v896, %v897
        %v899 = vrot.slane %v898, 1
        %v900 = vmax.f32 %v898, %v899
        %901 = vst.msk [vmem:[#allocation2 + $0x12] sm:$0x1] %vm760, %v900
        %v902 = vsel %vm746, %v688, -inf
        %v903 = vsel %vm746, %v693, -inf
        %v904 = vsel %vm746, %v698, -inf
        %v905 = vsel %vm746, %v703, -inf
        %v906 = vmax.f32 %v902, %v903
        %v907 = vmax.f32 %v904, %v905
        %v908 = vmax.f32 %v906, %v907
        %v909 = vrot.slane %v908, 4
        %v910 = vmax.f32 %v908, %v909
        %v911 = vrot.slane %v910, 2
        %v912 = vmax.f32 %v910, %v911
        %v913 = vrot.slane %v912, 1
        %v914 = vmax.f32 %v912, %v913
        %915 = vst.msk [vmem:[#allocation2 + $0x13] sm:$0x1] %vm760, %v914
        %v916 = vsel %vm746, %v708, -inf
        %v917 = vsel %vm746, %v713, -inf
        %v918 = vsel %vm746, %v718, -inf
        %v919 = vsel %vm746, %v723, -inf
        %v920 = vmax.f32 %v916, %v917
        %v921 = vmax.f32 %v918, %v919
        %v922 = vmax.f32 %v920, %v921
        %v923 = vrot.slane %v922, 4
        %v924 = vmax.f32 %v922, %v923
        %v925 = vrot.slane %v924, 2
        %v926 = vmax.f32 %v924, %v925
        %v927 = vrot.slane %v926, 1
        %v928 = vmax.f32 %v926, %v927
        %929 = vst.msk [vmem:[#allocation2 + $0x14] sm:$0x1] %vm760, %v928
        %v930 = vsel %vm746, %v728, -inf
        %v931 = vsel %vm746, %v733, -inf
        %v932 = vsel %vm746, %v738, -inf
        %v933 = vsel %vm746, %v743, -inf
        %v934 = vmax.f32 %v930, %v931
        %v935 = vmax.f32 %v932, %v933
        %v936 = vmax.f32 %v934, %v935
        %v937 = vrot.slane %v936, 4
        %v938 = vmax.f32 %v936, %v937
        %v939 = vrot.slane %v938, 2
        %v940 = vmax.f32 %v938, %v939
        %v941 = vrot.slane %v940, 1
        %v942 = vmax.f32 %v940, %v941
        %943 = vst.msk [vmem:[#allocation2 + $0x15] sm:$0x1] %vm760, %v942
        %v944 = vld [vmem:[#allocation2] sm:$0xff]
        %v945 = vld [vmem:[#allocation2 + $0x10] sm:$0xff]
        %946 = vxpose.xlu0.b32.start [1/16] %v944, 128
        %947 = vxpose.xlu0.b32.cont [2/16] %v945, 128
        %948 = vxpose.xlu0.b32.cont [3/16] 0.0, 128
        %949 = vxpose.xlu0.b32.cont [4/16] 0.0, 128
        %950 = vxpose.xlu0.b32.cont [5/16] 0.0, 128
        %951 = vxpose.xlu0.b32.cont [6/16] 0.0, 128
        %952 = vxpose.xlu0.b32.cont [7/16] 0.0, 128
        %953 = vxpose.xlu0.b32.cont [8/16] 0.0, 128
        %954 = vxpose.xlu0.b32.cont [9/16] 0.0, 128
        %955 = vxpose.xlu0.b32.cont [10/16] 0.0, 128
        %956 = vxpose.xlu0.b32.cont [11/16] 0.0, 128
        %957 = vxpose.xlu0.b32.cont [12/16] 0.0, 128
        %958 = vxpose.xlu0.b32.cont [13/16] 0.0, 128
        %959 = vxpose.xlu0.b32.cont [14/16] 0.0, 128
        %960 = vxpose.xlu0.b32.cont [15/16] 0.0, 128
        %961 = vxpose.xlu0.b32.end [16/16] 0.0, 128
        %v962 = vpop.trf.xlu0
        %v963 = vpop.trf.xlu0
        %v964 = vpop.trf.xlu0
        %v965 = vpop.trf.xlu0
        %v966 = vpop.trf.xlu0
        %v967 = vpop.trf.xlu0
        %v968 = vpop.trf.xlu0
        %v969 = vpop.trf.xlu0
        %v970 = vpop.trf.xlu0
        %v971 = vpop.trf.xlu0
        %v972 = vpop.trf.xlu0
        %v973 = vpop.trf.xlu0
        %v974 = vpop.trf.xlu0
        %v975 = vpop.trf.xlu0
        %v976 = vpop.trf.xlu0
        %v977 = vpop.trf.xlu0
        %vm978 = vcmask 113664
        %979 = vst.msk [vmem:[%s134] sm:$0xff] %vm978, %v962
        %s980 = sand.u32 %s71, 1
        %s981 = scalar_lea.sflag [#allocation4], %s980
        %s982 = sand.u32 %s71, 1
        %s983 = smul.addr %s982, 8
        %s984 = scalar_lea.vmem [#allocation3], %s983
        // Predicated region
        $region29: #{tpu_custom_call.1} parent=27 // pred_check
          %p985 = pneg %p81
        $region30: #{tpu_custom_call.1} parent=27 // pred_check_branch
          %987 = sbr.rel (%p985) target = $region32
        $region31: #{tpu_custom_call.1} parent=27 // pred_region
          %s989 = ssub.s32 128, 128
          %990 = vsyncadd %s981, %s989
          %s991 = smul.addr %s16, 128
          %s992 = scalar_lea.hbm %s2, %s991
          %s994 = sshll.u32 %s984, 4
          %s995 = int_to_ptr.vmem [resolvable:$true] %s994
          %997 = dma.vmem_to_hbm [thread:$0]  %s995, 128, %s992, %s981
        $region32: #{tpu_custom_call.1} parent=27 // pred_fallthru
          _
      $region28: #{tpu_custom_call.1} parent=5 // pred_fallthru
        _
      %p998 = scmp.le.s32.totalorder 2, %s11
      // Predicated region
      $region33: #{tpu_custom_call.1} parent=5 // pred_check
        %p999 = pneg %p998
      $region34: #{tpu_custom_call.1} parent=5 // pred_check_branch
        %1001 = sbr.rel (%p999) target = $region36
      $region35: #{tpu_custom_call.1} parent=5 // pred_region
        %s1002 = ssub.s32 %s11, 2
        // Predicated region
        $region37: #{tpu_custom_call.1} parent=35 // pred_check
          %p1003 = pneg %p87
        $region38: #{tpu_custom_call.1} parent=35 // pred_check_branch
          %1005 = sbr.rel (%p1003) target = $region40
        $region39: #{tpu_custom_call.1} parent=35 // pred_region
          %s1006 = sand.u32 %s72, 1
          %s1007 = scalar_lea.sflag [#allocation4], %s1006
          %s1008 = sand.u32 %s72, 1
          %s1009 = smul.addr %s1008, 8
          %s1010 = scalar_lea.vmem [#allocation3], %s1009
          %1011 = dma.done %s1007, 128
        $region40: #{tpu_custom_call.1} parent=35 // pred_fallthru
          _
      $region36: #{tpu_custom_call.1} parent=5 // pred_fallthru
        _
    $region6: #{tpu_custom_call.1} parent=1 // loop_footer
      %s15 = sadd.s32 1, %s11
    $region7: #{tpu_custom_call.1} parent=1 // loop_footer_branch
      %10 = sbr.rel target = $region3
    $region8: #{tpu_custom_call.1} parent=1 // loop_exit
      _
    %1012 = vsyncpa [#allocation4], 1
    %s1013 = scalar_lea.sflag [#allocation4], 1
    %1014 = vsyncpa %s1013, 1

</llo_original>
